<compile_context>
chip_gen: v7x
topology: tpu7x:2x2x1
jax: 0.10.0
libtpu: 0.0.40
codegen_flags: <defaults>
</compile_context>

<pallas_src>
import math
from functools import partial

import jax
import jax.numpy as jnp
from jax import lax
from jax.experimental import pallas as pl
from jax.experimental.pallas import tpu as pltpu


# Explicit scoped-VMEM budget: above the 16/32 MiB defaults, below v7x's 64 MiB physical.
VMEM_LIMIT_BYTES = 48 * 1024 * 1024


def _round_up(x, m):
    return ((x + m - 1) // m) * m


def _pick_divisor(dim, candidates):
    for c in candidates:
        if dim % c == 0:
            return c
    return dim


def _pick_seq_tile(T, target=128):
    if T <= target:
        return T
    for t in (target, 64, 32, 16, 8):
        if T % t == 0:
            return t
    return T


# ---------------------------------------------------------------------------
# Kernel 1: Conv1D == x @ W + b
# ---------------------------------------------------------------------------
def linear_kernel(x_ref, w_ref, b_ref, o_ref, acc_ref):
    k = pl.program_id(2)

    @pl.when(k == 0)
    def _init():
        acc_ref[...] = jnp.zeros_like(acc_ref)

    acc_ref[...] += jnp.dot(x_ref[...], w_ref[...],
                            preferred_element_type=jnp.float32)

    @pl.when(k == pl.num_programs(2) - 1)
    def _finalize():
        o_ref[...] = (acc_ref[...] + b_ref[...].astype(jnp.float32)).astype(o_ref.dtype)


def conv1d(x2d, w, b):
    """x2d: (M, K), w: (K, N), b: (N,) -> (M, N)."""
    M, K = x2d.shape
    N = w.shape[1]

    # MXU-sized row tile when M is large; pad-to-8 rows otherwise.
    if M >= 256 and M % 256 == 0:
        tm = 256
    elif M >= 128:
        tm = 128
    else:
        tm = _round_up(M, 8)
    M_pad = _round_up(M, tm)
    if M_pad != M:
        x2d = jnp.pad(x2d, ((0, M_pad - M), (0, 0)))

    # Keep weight slabs small so double-buffering fits VMEM at GPT-2 sizes.
    tn = _pick_divisor(N, (512, 384, 256, 128))
    tk = K if K <= 2048 else _pick_divisor(K, (1024, 512, 256, 128))

    grid = (M_pad // tm, N // tn, K // tk)

    out = pl.pallas_call(
        linear_kernel,
        out_shape=jax.ShapeDtypeStruct((M_pad, N), x2d.dtype),
        grid=grid,
        in_specs=[
            pl.BlockSpec((tm, tk), lambda i, j, k: (i, k)),
            pl.BlockSpec((tk, tn), lambda i, j, k: (k, j)),
            pl.BlockSpec((1, tn), lambda i, j, k: (0, j)),
        ],
        out_specs=pl.BlockSpec((tm, tn), lambda i, j, k: (i, j)),
        scratch_shapes=[pltpu.VMEM((tm, tn), jnp.float32)],
        compiler_params=pltpu.CompilerParams(
            dimension_semantics=("parallel", "parallel", "arbitrary"),
            vmem_limit_bytes=VMEM_LIMIT_BYTES,
        ),
    )(x2d, w, b.reshape(1, N))
    return out[:M] if M_pad != M else out


# ---------------------------------------------------------------------------
# Kernel 2: KV-tiled causal flash attention on (B, T, H, D) layout
# ---------------------------------------------------------------------------
def flash_attn_kernel(q_ref, k_ref, v_ref, o_ref, m_sc, l_sc, acc_sc, *, scale):
    # q_ref: (tq, H, D); k_ref/v_ref: (tkv, H, D); o_ref: (tq, H*D)
    qi = pl.program_id(1)
    ki = pl.program_id(2)

    tq, n_head, head_dim = q_ref.shape
    tkv = k_ref.shape[0]

    @pl.when(ki == 0)
    def _init():
        m_sc[...] = jnp.full_like(m_sc, -jnp.inf)
        l_sc[...] = jnp.zeros_like(l_sc)
        acc_sc[...] = jnp.zeros_like(acc_sc)

    def tile_update(apply_mask):
        if apply_mask:
            # Causal mask only exists on the diagonal tile (tq == tkv).
            row = lax.broadcasted_iota(jnp.int32, (tq, tkv), 0)
            col = lax.broadcasted_iota(jnp.int32, (tq, tkv), 1)
            keep = col <= row

        q_scale = 1.0 / math.sqrt(head_dim)

        for h in range(n_head):
            qh = q_ref[:, h, :]                       # (tq,  D)
            kh = k_ref[:, h, :]                       # (tkv, D)
            vh = v_ref[:, h, :]                       # (tkv, D)
            if scale:
                # Fold 1/sqrt(D) into q: T*D multiplies instead of T*T divides.
                qh = qh * jnp.asarray(q_scale, dtype=qh.dtype)

            # scores = q @ k^T without materializing the transpose (contract on D).
            s = lax.dot_general(qh, kh, (((1,), (1,)), ((), ())),
                                preferred_element_type=jnp.float32)   # (tq, tkv)
            if apply_mask:
                # Match PyTorch masked_bias (-10000.0), not -inf.
                s = jnp.where(keep, s, jnp.float32(-10000.0))

            m_prev = m_sc[h]                          # (tq, 1)
            l_prev = l_sc[h]
            m_new = jnp.maximum(m_prev, jnp.max(s, axis=-1, keepdims=True))
            alpha = jnp.exp(m_prev - m_new)
            p = jnp.exp(s - m_new)

            l_sc[h] = alpha * l_prev + jnp.sum(p, axis=-1, keepdims=True)
            pv = jnp.dot(p.astype(vh.dtype), vh,
                         preferred_element_type=jnp.float32)          # (tq, D)
            acc_sc[h] = alpha * acc_sc[h] + pv
            m_sc[h] = m_new

    # Below-diagonal kv tiles: no mask work at all.
    @pl.when(ki < qi)
    def _below_diag():
        tile_update(apply_mask=False)

    # Diagonal tile: mask, then finalize (it is the last tile with unmasked keys).
    @pl.when(ki == qi)
    def _diag_and_finalize():
        tile_update(apply_mask=True)
        outs = []
        for h in range(n_head):
            inv_l = pl.reciprocal(l_sc[h], approx=True)   # EUP vrcp, ~free slot
            outs.append(acc_sc[h] * inv_l)                # (tq, D)
        # Heads concatenated along lanes -> lane-dense (tq, H*D) merged output.
        o_ref[...] = jnp.concatenate(outs, axis=-1).astype(o_ref.dtype)
    # NB: kv tiles with ki > qi are fully masked -> skipped entirely (and their
    # index_map clamps to the diagonal block, so no DMA is issued for them).


def causal_flash_attention(qkv, scale):
    """qkv: (B, T, 3, H, D) -> (B, T, H*D) with heads already merged."""
    B, T, _, H, D = qkv.shape
    tq = _pick_seq_tile(T)
    tkv = tq
    nq = T // tq

    qkv_block = (None, tq, None, H, D)   # None dims are squeezed in the kernel
    q_map = lambda b, qi, ki: (b, qi, 0, 0, 0)
    k_map = lambda b, qi, ki: (b, jnp.minimum(ki, qi), 1, 0, 0)   # clamp -> no DMA for skipped tiles
    v_map = lambda b, qi, ki: (b, jnp.minimum(ki, qi), 2, 0, 0)
    o_map = lambda b, qi, ki: (b, qi, 0)

    return pl.pallas_call(
        partial(flash_attn_kernel, scale=scale),
        out_shape=jax.ShapeDtypeStruct((B, T, H * D), qkv.dtype),
        grid=(B, nq, nq),
        in_specs=[
            pl.BlockSpec(qkv_block, q_map),
            pl.BlockSpec(qkv_block, k_map),
            pl.BlockSpec(qkv_block, v_map),
        ],
        out_specs=pl.BlockSpec((None, tq, H * D), o_map),
        scratch_shapes=[
            pltpu.VMEM((H, tq, 1), jnp.float32),   # running max
            pltpu.VMEM((H, tq, 1), jnp.float32),   # running sum
            pltpu.VMEM((H, tq, D), jnp.float32),   # output accumulator
        ],
        compiler_params=pltpu.CompilerParams(
            dimension_semantics=("parallel", "parallel", "arbitrary"),
            vmem_limit_bytes=VMEM_LIMIT_BYTES,
        ),
    )(qkv, qkv, qkv)


# ---------------------------------------------------------------------------
# GPT2SelfAttention forward
# ---------------------------------------------------------------------------
def gpt2_self_attention(hidden_states, params, n_head, scale=False):
    """hidden_states: (B, T, nx)."""
    B, T, nx = hidden_states.shape
    D = nx // n_head

    x2d = hidden_states.reshape(B * T, nx)

    # c_attn: (B*T, 3*nx); reshape to (B, T, 3, H, D) is free (no transpose).
    qkv = conv1d(x2d, params["c_attn_w"], params["c_attn_b"])
    qkv = qkv.reshape(B, T, 3, n_head, D)

    # Attention consumes q/k/v straight out of this layout via BlockSpec index maps
    # and emits the merged-head (B, T, nx) result directly.
    a = causal_flash_attention(qkv, scale)

    # c_proj
    out = conv1d(a.reshape(B * T, nx), params["c_proj_w"], params["c_proj_b"])
    return out.reshape(B, T, nx)


# ---------------------------------------------------------------------------
# Pure-JAX reference (mirrors the PyTorch module) for the correctness check
# ---------------------------------------------------------------------------
def reference(hidden_states, params, n_head, scale=False):
    B, T, nx = hidden_states.shape
    hd = nx // n_head
    qkv = hidden_states.reshape(-1, nx) @ params["c_attn_w"] + params["c_attn_b"]
    qkv = qkv.reshape(B, T, 3 * nx)
    q, k, v = jnp.split(qkv, 3, axis=-1)
    q = q.reshape(B, T, n_head, hd).transpose(0, 2, 1, 3)
    k = k.reshape(B, T, n_head, hd).transpose(0, 2, 3, 1)
    v = v.reshape(B, T, n_head, hd).transpose(0, 2, 1, 3)
    w = jnp.einsum("bhqd,bhdk->bhqk", q, k)
    if scale:
        w = w / jnp.sqrt(jnp.float32(hd))
    mask = jnp.tril(jnp.ones((T, T), dtype=bool))[None, None]
    w = jnp.where(mask, w, jnp.float32(-10000.0))
    w = jax.nn.softmax(w, axis=-1)
    a = jnp.einsum("bhqk,bhkd->bhqd", w, v)
    a = a.transpose(0, 2, 1, 3).reshape(B, T, nx)
    return (a.reshape(-1, nx) @ params["c_proj_w"] + params["c_proj_b"]).reshape(B, T, nx)


def make_params(key, nx):
    k_wa, k_wp = jax.random.split(key)
    return {
        "c_attn_w": 0.02 * jax.random.normal(k_wa, (nx, 3 * nx), dtype=jnp.float32),
        "c_attn_b": 0.01 * jnp.ones((3 * nx,), dtype=jnp.float32),
        "c_proj_w": 0.02 * jax.random.normal(k_wp, (nx, nx), dtype=jnp.float32),
        "c_proj_b": 0.01 * jnp.ones((nx,), dtype=jnp.float32),
    }


if __name__ == "__main__":
    key = jax.random.PRNGKey(0)

    configs = [
        # Primary small config consistent with the module: batch=2, seq=8, nx=32, heads=4.
        dict(B=2, T=8, nx=32, n_head=4, scale=False),
        dict(B=2, T=8, nx=32, n_head=4, scale=True),
        # Multi-tile config: exercises kv tiling, diagonal masking and tile skipping.
        dict(B=2, T=256, nx=256, n_head=4, scale=True),
    ]

    for cfg in configs:
        key, kh, kp = jax.random.split(key, 3)
        hidden = jax.random.normal(kh, (cfg["B"], cfg["T"], cfg["nx"]), dtype=jnp.float32)
        params = make_params(kp, cfg["nx"])

        out = jax.block_until_ready(
            gpt2_self_attention(hidden, params, cfg["n_head"], scale=cfg["scale"]))
        ref = reference(hidden, params, cfg["n_head"], scale=cfg["scale"])

        assert out.shape == hidden.shape
        # Tolerance accommodates the approximate EUP reciprocal in the softmax denominator.
        assert jnp.allclose(out, ref, atol=2e-3, rtol=2e-3), f"mismatch vs reference: {cfg}"

    print("KERNEL_OK")
</pallas_src>

<mosaic_0001>
module attributes {stable_mosaic.version = 11 : i64} {
  func.func @linear_kernel(%arg0: i32, %arg1: i32, %arg2: i32, %arg3: memref<16x32xf32, #tpu.memory_space<vmem>>, %arg4: memref<32x96xf32, #tpu.memory_space<vmem>>, %arg5: memref<1x96xf32, #tpu.memory_space<vmem>>, %arg6: memref<16x96xf32, #tpu.memory_space<vmem>>, %arg7: memref<16x96xf32, #tpu.memory_space<vmem>>) attributes {dimension_semantics = [#tpu.dimension_semantics<parallel>, #tpu.dimension_semantics<parallel>, #tpu.dimension_semantics<arbitrary>], iteration_bounds = array<i64: 1, 1, 1>, scalar_prefetch = 0 : i64, scratch_operands = 1 : i64, tpu.core_type = #tpu.core_type<tc>, window_params = [{transform_indices = @transform_0, window_bounds = array<i64: 16, 32>}, {transform_indices = @transform_1, window_bounds = array<i64: 32, 96>}, {transform_indices = @transform_2, window_bounds = array<i64: 1, 96>}, {transform_indices = @transform_3, window_bounds = array<i64: 16, 96>}]} {
    %c0_i32 = arith.constant 0 : i32
    %0 = arith.cmpi eq, %arg2, %c0_i32 : i32
    %1 = arith.extui %0 : i1 to i32
    %c0_i32_0 = arith.constant 0 : i32
    %2 = arith.cmpi ne, %1, %c0_i32_0 : i32
    scf.if %2 {
      %cst_10 = arith.constant 0.000000e+00 : f32
      %12 = vector.broadcast %cst_10 : f32 to vector<16x96xf32>
      %c0_11 = arith.constant 0 : index
      %c0_12 = arith.constant 0 : index
      %13 = vector.load %arg7[%c0_11, %c0_12] : memref<16x96xf32, #tpu.memory_space<vmem>>, vector<16x96xf32>
      tpu.vector_store %arg7[%c0_11, %c0_12], %12 {strides = array<i32>} : memref<16x96xf32, #tpu.memory_space<vmem>>, vector<16x96xf32>,
    } else {
    }
    %c0 = arith.constant 0 : index
    %c0_1 = arith.constant 0 : index
    %3 = vector.load %arg7[%c0, %c0_1] : memref<16x96xf32, #tpu.memory_space<vmem>>, vector<16x96xf32>
    %c0_2 = arith.constant 0 : index
    %c0_3 = arith.constant 0 : index
    %4 = vector.load %arg3[%c0_2, %c0_3] : memref<16x32xf32, #tpu.memory_space<vmem>>, vector<16x32xf32>
    %c0_4 = arith.constant 0 : index
    %c0_5 = arith.constant 0 : index
    %5 = vector.load %arg4[%c0_4, %c0_5] : memref<32x96xf32, #tpu.memory_space<vmem>>, vector<32x96xf32>
    %cst = arith.constant dense<0.000000e+00> : vector<16x96xf32>
    %6 = tpu.matmul %4, %5, %cst {dimension_numbers = #tpu.dot_dimension_numbers<[1], [0], [0], [1], [0, 0, 1, 1], [], []>} : vector<16x32xf32>, vector<32x96xf32>, vector<16x96xf32> -> vector<16x96xf32>
    %7 = arith.addf %3, %6 : vector<16x96xf32>
    %c0_6 = arith.constant 0 : index
    %c0_7 = arith.constant 0 : index
    %8 = vector.load %arg7[%c0_6, %c0_7] : memref<16x96xf32, #tpu.memory_space<vmem>>, vector<16x96xf32>
    tpu.vector_store %arg7[%c0_6, %c0_7], %7 {strides = array<i32>} : memref<16x96xf32, #tpu.memory_space<vmem>>, vector<16x96xf32>,
    %c0_i32_8 = arith.constant 0 : i32
    %9 = arith.cmpi eq, %arg2, %c0_i32_8 : i32
    %10 = arith.extui %9 : i1 to i32
    %c0_i32_9 = arith.constant 0 : i32
    %11 = arith.cmpi ne, %10, %c0_i32_9 : i32
    scf.if %11 {
      %c0_10 = arith.constant 0 : index
      %c0_11 = arith.constant 0 : index
      %12 = vector.load %arg7[%c0_10, %c0_11] : memref<16x96xf32, #tpu.memory_space<vmem>>, vector<16x96xf32>
      %c0_12 = arith.constant 0 : index
      %c0_13 = arith.constant 0 : index
      %13 = vector.load %arg5[%c0_12, %c0_13] : memref<1x96xf32, #tpu.memory_space<vmem>>, vector<1x96xf32>
      %14 = vector.broadcast %13 : vector<1x96xf32> to vector<16x96xf32>
      %15 = arith.addf %12, %14 : vector<16x96xf32>
      %c0_14 = arith.constant 0 : index
      %c0_15 = arith.constant 0 : index
      %16 = vector.load %arg6[%c0_14, %c0_15] : memref<16x96xf32, #tpu.memory_space<vmem>>, vector<16x96xf32>
      tpu.vector_store %arg6[%c0_14, %c0_15], %15 {strides = array<i32>} : memref<16x96xf32, #tpu.memory_space<vmem>>, vector<16x96xf32>,
    } else {
    }
    return
  }
  func.func @transform_0(%arg0: i32, %arg1: i32, %arg2: i32) -> (i32, i32) {
    %c0_i32 = arith.constant 0 : i32
    return %arg0, %arg2 : i32, i32
  }
  func.func @transform_1(%arg0: i32, %arg1: i32, %arg2: i32) -> (i32, i32) {
    %c0_i32 = arith.constant 0 : i32
    return %arg2, %arg1 : i32, i32
  }
  func.func @transform_2(%arg0: i32, %arg1: i32, %arg2: i32) -> (i32, i32) {
    %c0_i32 = arith.constant 0 : i32
    %c0_i32_0 = arith.constant 0 : i32
    return %c0_i32, %arg1 : i32, i32
  }
  func.func @transform_3(%arg0: i32, %arg1: i32, %arg2: i32) -> (i32, i32) {
    %c0_i32 = arith.constant 0 : i32
    return %arg0, %arg1 : i32, i32
  }
}

</mosaic_0001>

<llo_original>
// kernel: tpu_custom_call.1
$region0: #{tpu_custom_call.1}
  #allocation0 [shape = 'u32[]', space=smem, size = 0x4, offset = 0x4, fixed_abs, tag = 'smem constant byte address 0x4 - core index']
  #allocation1 [shape = 'u32[144,128]{1,0:T(1,128)}', space=vmem, size = 0x12000, scoped, tag = 'internal scratch']
  #allocation2 [shape = 'f32[16,96]{1,0:T(8,128)}', space=vmem, size = 0x2000, scoped, tag = 'scratch operand']
  %s0 = inlined_call_operand.hbm [shape: f32[16,32], index: 0, kind: input, shape index: {}]
  %s1 = inlined_call_operand.hbm [shape: f32[32,96], index: 1, kind: input, shape index: {}]
  %s2 = inlined_call_operand.vmem [shape: f32[1,96], index: 2, kind: input, shape index: {}]
  %s3 = inlined_call_operand.hbm [shape: f32[16,96], index: 3, kind: output, shape index: {}]
  %s4 = sld [smem:[#allocation0]]
  $region38: #{tpu_custom_call.1} parent=0
    _
  %s6 = ssub.s32 1, %s4
  %s7 = scalar_select 0, %s6, %s4
  $region1: #{tpu_custom_call.1} parent=0
    #allocation3 [shape = 'u8[8192]{0}', space=vmem, size = 0x2000, scoped, tag = 'input window, operand 0, single buffered']
    #allocation4 [shape = 's32[1]{0}', space=sflag, size = 0x4, scoped, tag = 'scoped memory for tpu_custom_call.1']
    #allocation5 [shape = 's32[1]{0}', space=sflag, size = 0x4, scoped, tag = 'scoped memory for tpu_custom_call.1']
    #allocation6 [shape = 'u8[16384]{0}', space=vmem, size = 0x4000, scoped, tag = 'input window, operand 1, single buffered']
    #allocation7 [shape = 's32[1]{0}', space=sflag, size = 0x4, scoped, tag = 'scoped memory for tpu_custom_call.1']
    #allocation8 [shape = 'u8[8192]{0}', space=vmem, size = 0x2000, scoped, tag = 'output window, operand 0, single buffered']
    %8 = vsyncpa [#allocation4], 0
    %9 = vsyncpa [#allocation7], 0
    %10 = vsyncpa [#allocation5], 0
    // Predicated region
    $region2: #{tpu_custom_call.1} parent=1 // pred_check
      _
    $region3: #{tpu_custom_call.1} parent=1 // pred_check_branch
      %12 = sbr.rel (0) target = $region5
    $region4: #{tpu_custom_call.1} parent=1 // pred_region
      %s14 = ssub.s32 256, 256
      %15 = vsyncadd [#allocation4], %s14
      %s16 = sshll.u32 [#allocation3], 4
      %s17 = int_to_ptr.vmem [resolvable:$true] %s16
      %22 = dma.hbm_to_vmem [thread:$0]  %s0, 256, %s17, [#allocation4], 128, 128, 8
    $region5: #{tpu_custom_call.1} parent=1 // pred_fallthru
      _
    // Predicated region
    $region6: #{tpu_custom_call.1} parent=1 // pred_check
      _
    $region7: #{tpu_custom_call.1} parent=1 // pred_check_branch
      %24 = sbr.rel (0) target = $region9
    $region8: #{tpu_custom_call.1} parent=1 // pred_region
      %s26 = ssub.s32 512, 512
      %27 = vsyncadd [#allocation7], %s26
      %s28 = sshll.u32 [#allocation6], 4
      %s29 = int_to_ptr.vmem [resolvable:$true] %s28
      %34 = dma.hbm_to_vmem [thread:$0]  %s1, 512, %s29, [#allocation7], 128, 128, 8
    $region9: #{tpu_custom_call.1} parent=1 // pred_fallthru
      _
    // Predicated region
    $region10: #{tpu_custom_call.1} parent=1 // pred_check
      _
    $region11: #{tpu_custom_call.1} parent=1 // pred_check_branch
      %36 = sbr.rel (0) target = $region13
    $region12: #{tpu_custom_call.1} parent=1 // pred_region
      _
    $region13: #{tpu_custom_call.1} parent=1 // pred_fallthru
      _
    // Predicated region
    $region14: #{tpu_custom_call.1} parent=1 // pred_check
      _
    $region15: #{tpu_custom_call.1} parent=1 // pred_check_branch
      %38 = sbr.rel (0) target = $region17
    $region16: #{tpu_custom_call.1} parent=1 // pred_region
      %39 = dma.done [#allocation4], 256
    $region17: #{tpu_custom_call.1} parent=1 // pred_fallthru
      _
    // Predicated region
    $region18: #{tpu_custom_call.1} parent=1 // pred_check
      _
    $region19: #{tpu_custom_call.1} parent=1 // pred_check_branch
      %41 = sbr.rel (0) target = $region21
    $region20: #{tpu_custom_call.1} parent=1 // pred_region
      %42 = dma.done [#allocation7], 512
    $region21: #{tpu_custom_call.1} parent=1 // pred_fallthru
      _
    %p43 = scmp.eq.s32.totalorder 0, 0
    // Predicated region
    $region22: #{tpu_custom_call.1} parent=1 // pred_check
      %p44 = pneg %p43
    $region23: #{tpu_custom_call.1} parent=1 // pred_check_branch
      %46 = sbr.rel (%p44) target = $region25
    $region24: #{tpu_custom_call.1} parent=1 // pred_region
      %vm47 = vcmask 785408
      %48 = vst.msk [vmem:[#allocation2] sm:$0xff] %vm47, 0.0
      %49 = vst.msk [vmem:[#allocation2 + $0x8] sm:$0xff] %vm47, 0.0
    $region25: #{tpu_custom_call.1} parent=1 // pred_fallthru
      _
    %v50 = vld [vmem:[#allocation2] sm:$0xff]
    %v51 = vld [vmem:[#allocation2 + $0x8] sm:$0xff]
    %v52 = vld [vmem:[#allocation3] sm:$0xff]
    %v53 = vld [vmem:[#allocation3 + $0x8] sm:$0xff]
    %v54 = vld [vmem:[#allocation6] sm:$0xff]
    %v55 = vld [vmem:[#allocation6 + $0x8] sm:$0xff]
    %v56 = vld [vmem:[#allocation6 + $0x10] sm:$0xff]
    %v57 = vld [vmem:[#allocation6 + $0x18] sm:$0xff]
    %vm58 = vcmask 261120
    %v60 = vsel %vm58, %v52, 0
    %v63 = vsel %vm58, %v53, 0
    %65 = vmatprep.subr.mxu0 0.0
    %66 = vmatpush1.msra.mxu0 %v54
    %67 = vmatprep.subr.mxu0 0.0
    %68 = vmatpush1.msra.mxu0 %v55
    %69 = vmatprep.subr.mxu0 0.0
    %70 = vmatpush1.msra.mxu0 %v56
    %71 = vmatprep.subr.mxu0 0.0
    %72 = vmatpush1.msra.mxu0 %v57
    %73 = vmatprep.subr.mxu0 0.0
    %74 = vmatpush1.msra.mxu0 0.0
    %75 = vmatprep.subr.mxu0 0.0
    %76 = vmatpush1.msra.mxu0 0.0
    %77 = vmatprep.subr.mxu0 0.0
    %78 = vmatpush1.msra.mxu0 0.0
    %79 = vmatprep.subr.mxu0 0.0
    %80 = vmatpush1.msra.mxu0 0.0
    %81 = vmatprep.subr.mxu0 0.0
    %82 = vmatpush1.msra.mxu0 0.0
    %83 = vmatprep.subr.mxu0 0.0
    %84 = vmatpush1.msra.mxu0 0.0
    %85 = vmatprep.subr.mxu0 0.0
    %86 = vmatpush1.msra.mxu0 0.0
    %87 = vmatprep.subr.mxu0 0.0
    %88 = vmatpush1.msra.mxu0 0.0
    %89 = vmatprep.subr.mxu0 0.0
    %90 = vmatpush1.msra.mxu0 0.0
    %91 = vmatprep.subr.mxu0 0.0
    %92 = vmatpush1.msra.mxu0 0.0
    %93 = vmatprep.subr.mxu0 0.0
    %94 = vmatpush1.msra.mxu0 0.0
    %95 = vmatprep.subr.mxu0 0.0
    %96 = vmatpush1.msra.mxu0 0.0
    %97 = vmatprep.subr.mxu0 0.0
    %98 = vmatpush1.msra.mxu0 0.0
    %99 = vmatprep.subr.mxu0 0.0
    %100 = vmatpush1.msra.mxu0 0.0
    %101 = vmatprep.subr.mxu0 0.0
    %102 = vmatpush1.msra.mxu0 0.0
    %103 = vmatprep.subr.mxu0 0.0
    %104 = vmatpush1.msra.mxu0 0.0
    %105 = vmatprep.subr.mxu0 0.0
    %106 = vmatpush1.msra.mxu0 0.0
    %107 = vmatprep.subr.mxu0 0.0
    %108 = vmatpush1.msra.mxu0 0.0
    %109 = vmatprep.subr.mxu0 0.0
    %110 = vmatpush1.msra.mxu0 0.0
    %111 = vmatprep.subr.mxu0 0.0
    %112 = vmatpush1.msra.mxu0 0.0
    %113 = vmatprep.subr.mxu0 0.0
    %114 = vmatpush1.msra.mxu0 0.0
    %115 = vmatprep.subr.mxu0 0.0
    %116 = vmatpush1.msra.mxu0 0.0
    %117 = vmatprep.subr.mxu0 0.0
    %118 = vmatpush1.msra.mxu0 0.0
    %119 = vmatprep.subr.mxu0 0.0
    %120 = vmatpush1.msra.mxu0 0.0
    %121 = vmatprep.subr.mxu0 0.0
    %122 = vmatpush1.msra.mxu0 0.0
    %123 = vmatprep.subr.mxu0 0.0
    %124 = vmatpush1.msra.mxu0 0.0
    %125 = vmatprep.subr.mxu0 0.0
    %126 = vmatpush1.msra.mxu0 0.0
    %127 = vmatprep.subr.mxu0 0.0
    %128 = vmatpush1.msra.mxu0 0.0
    %129 = vmatprep.mubr.f32.mxu0 0.0
    %130 = vmatmul.mubr.f32.gmra.mrb[0].mxu0 %v60
    %v131 = vpop.f32.mrb[0].mxu0
    %v132 = vadd.f32 0.0, %v131
    %v133 = vpop.f32.mrb[0].mxu0
    %134 = vmatprep.mubr.f32.mxu0 0.0
    %135 = vmatmul.mubr.f32.gmra.mrb[0].mxu0 %v63
    %v136 = vpop.f32.mrb[0].mxu0
    %v137 = vadd.f32 0.0, %v136
    %v138 = vpop.f32.mrb[0].mxu0
    %139 = vdwg.mxu0
    %v140 = vadd.f32 %v50, %v132
    %v141 = vadd.f32 %v51, %v137
    %vm142 = vcmask 785408
    %143 = vst.msk [vmem:[#allocation2] sm:$0xff] %vm142, %v140
    %144 = vst.msk [vmem:[#allocation2 + $0x8] sm:$0xff] %vm142, %v141
    // Predicated region
    $region26: #{tpu_custom_call.1} parent=1 // pred_check
      %p145 = pneg %p43
    $region27: #{tpu_custom_call.1} parent=1 // pred_check_branch
      %147 = sbr.rel (%p145) target = $region29
    $region28: #{tpu_custom_call.1} parent=1 // pred_region
      %v148 = vld [vmem:[#allocation2] sm:$0xff]
      %v149 = vld [vmem:[#allocation2 + $0x8] sm:$0xff]
      %v150 = vld [vmem:[%s2] sm:$0x1]
      %v152 = vlaneseq
      %v153 = vshrl.u32 %v152, 7
      %v154 = vsub.s32 0, %v153
      %v155 = vrot.slane %v150, %v154
      %v157 = vadd.f32 %v148, %v155
      %v158 = vadd.f32 %v149, %v155
      %159 = vst.msk [vmem:[#allocation8] sm:$0xff] %vm142, %v157
      %160 = vst.msk [vmem:[#allocation8 + $0x8] sm:$0xff] %vm142, %v158
    $region29: #{tpu_custom_call.1} parent=1 // pred_fallthru
      _
    // Predicated region
    $region30: #{tpu_custom_call.1} parent=1 // pred_check
      _
    $region31: #{tpu_custom_call.1} parent=1 // pred_check_branch
      %162 = sbr.rel (0) target = $region33
    $region32: #{tpu_custom_call.1} parent=1 // pred_region
      %s164 = ssub.s32 256, 256
      %165 = vsyncadd [#allocation5], %s164
      %s166 = sshll.u32 [#allocation8], 4
      %s167 = int_to_ptr.vmem [resolvable:$true] %s166
      %172 = dma.vmem_to_hbm [thread:$0]  %s167, 256, %s3, [#allocation5], 128, 128, 8
    $region33: #{tpu_custom_call.1} parent=1 // pred_fallthru
      _
    // Predicated region
    $region34: #{tpu_custom_call.1} parent=1 // pred_check
      _
    $region35: #{tpu_custom_call.1} parent=1 // pred_check_branch
      %174 = sbr.rel (0) target = $region37
    $region36: #{tpu_custom_call.1} parent=1 // pred_region
      %175 = dma.done [#allocation5], 256
    $region37: #{tpu_custom_call.1} parent=1 // pred_fallthru
      _
    %176 = vsyncpa [#allocation4], 1
    %177 = vsyncpa [#allocation7], 1
    %178 = vsyncpa [#allocation5], 1

</llo_original>
